<compile_context>
chip_gen: v5e
topology: v5e:2x2
jax: 0.10.0
libtpu: 0.0.40
codegen_flags: <defaults>
</compile_context>

<pallas_src>
import jax
import jax.numpy as jnp
from jax.experimental import pallas as pl
from jax.experimental.pallas import tpu as pltpu


# ---------------------------------------------------------------------------
# Pallas kernel 1: fused 3x3 stride-2 pad-1 conv over one halo'd row strip.
#
#   xm_ref: (2*tho, Wo+1, 2*C) bf16  padded rows [2*r*tho, 2*(r+1)*tho)
#   xh_ref: (1,     Wo+1, 2*C) bf16  halo row 2*(r+1)*tho
#   w_ref : (3, 3, tn, C)      bf16  weights as (kh, kw, cout, cin)
#   b_ref : (tn, 1)            f32   bias (column => broadcasts over lanes)
#   o_ref : (tn, tho*Wo)       f32   channel-major output tile (lane-dense)
#
# The padded width W+2 = 2*(Wo+1) was pre-reshaped (free) so that horizontal
# even/odd columns are contiguous lane halves [:C] / [C:] -> no strided lane
# access is ever needed; kw=2 is just a +1 shift on the sublane (pair) axis.
# ---------------------------------------------------------------------------
def _conv3x3s2_kernel(xm_ref, xh_ref, w_ref, b_ref, o_ref):
    two_tho, wop, c2 = xm_ref.shape
    tho = two_tho // 2
    Wo = wop - 1
    C = c2 // 2
    tn = o_ref.shape[0]

    xm = xm_ref[...].reshape(tho, 2, wop, c2)     # split rows into (even, odd)
    xh = xh_ref[...]                              # (1, wop, c2)

    x_even = xm[:, 0]                             # padded rows +0, +2, ...
    x_odd = xm[:, 1]                              # padded rows +1, +3, ...
    if tho > 1:
        x_even_next = jnp.concatenate([x_even[1:], xh], axis=0)
    else:
        x_even_next = xh                          # padded rows +2, +4, ...
    rows_by_kh = (x_even, x_odd, x_even_next)

    acc = jnp.zeros((tn, tho * Wo), jnp.float32)
    for kh in range(3):
        rows = rows_by_kh[kh]                     # (tho, Wo+1, 2*C)
        for kw in range(3):
            if kw == 0:
                p = rows[:, :Wo, :C]              # padded col 2*wo
            elif kw == 1:
                p = rows[:, :Wo, C:]              # padded col 2*wo + 1
            else:
                p = rows[:, 1:, :C]               # padded col 2*wo + 2
            p2 = p.reshape(tho * Wo, C)           # (M, C)
            wk = w_ref[kh, kw]                    # (tn, C)
            # (tn, C) . (M, C)^T  ->  (tn, M), f32 accumulation on the MXU.
            acc = acc + jax.lax.dot_general(
                wk, p2,
                dimension_numbers=(((1,), (1,)), ((), ())),
                preferred_element_type=jnp.float32)

    o_ref[...] = (acc + b_ref[...]).astype(o_ref.dtype)


def _pallas_conv3x3_s2(x_nchw, weight, bias, out_dtype=jnp.float32):
    """3x3 / stride-2 / pad-1 conv.  x: (N,C,H,W) -> (N,Cout,H/2,W/2)."""
    N, C, H, W = x_nchw.shape
    Cout = weight.shape[0]
    # TODO(synk): odd spatial dims (PyTorch handles via its own padding rule)
    # are not supported by the paired-column layout trick.
    assert H % 2 == 0 and W % 2 == 0
    Ho, Wo = H // 2, W // 2
    Wop = Wo + 1

    # Single fused prep pass: NCHW -> NHWC, cast to bf16, spatial zero-pad.
    xp = jnp.pad(jnp.transpose(x_nchw, (0, 2, 3, 1)).astype(jnp.bfloat16),
                 ((0, 0), (1, 1), (1, 1), (0, 0)))          # (N, H+2, W+2, C)
    xr = xp.reshape(N, H + 2, Wop, 2 * C)                   # free column-pairing
    w_t = jnp.transpose(weight, (2, 3, 0, 1)).astype(jnp.bfloat16)  # (3,3,Cout,C)
    b_col = bias.astype(jnp.float32).reshape(Cout, 1)

    # ---- tile sizes -------------------------------------------------------
    if Cout <= 512:
        tn = Cout
    elif Cout % 512 == 0:
        tn = 512
    elif Cout % 256 == 0:
        tn = 256
    elif Cout % 128 == 0:
        tn = 128
    else:
        tn = Cout
    J = Cout // tn

    # Largest divisor of Ho whose main strip (2*tho padded rows, bf16) stays
    # ~<= 2 MiB and keeps the channel-major output block lane-dense
    # ((tho*Wo) % 128 == 0) or full (tho == Ho).
    strip_row_bytes = 2 * Wop * 2 * C * 2
    cap = 2 << 20
    tho = Ho
    for d in range(Ho, 0, -1):
        if Ho % d:
            continue
        if d != Ho and (d * Wo) % 128 != 0:
            continue
        tho = d
        if d * strip_row_bytes <= cap:
            break
    R = Ho // tho

    grid = (J, N, R)   # j outermost (weight stays resident), r innermost.

    out = pl.pallas_call(
        _conv3x3s2_kernel,
        out_shape=jax.ShapeDtypeStruct((N, Cout, Ho * Wo), out_dtype),
        grid_spec=pltpu.PrefetchScalarGridSpec(
            num_scalar_prefetch=0,
            grid=grid,
            in_specs=[
                # main halo'd row strip
                pl.BlockSpec((None, 2 * tho, Wop, 2 * C),
                             lambda j, n, r: (n, r, 0, 0)),
                # single halo row (block size 1 -> block index == row index)
                pl.BlockSpec((None, 1, Wop, 2 * C),
                             lambda j, n, r: (n, 2 * tho * (r + 1), 0, 0)),
                # full (kh, kw, Cout-tile, Cin) weight block, VMEM-resident
                pl.BlockSpec((3, 3, tn, C), lambda j, n, r: (0, 0, j, 0)),
                # bias column
                pl.BlockSpec((tn, 1), lambda j, n, r: (j, 0)),
            ],
            out_specs=pl.BlockSpec((None, tn, tho * Wo),
                                   lambda j, n, r: (n, j, r)),
        ),
        compiler_params=pltpu.CompilerParams(
            dimension_semantics=("parallel", "parallel", "parallel"),
            vmem_limit_bytes=48 * 1024 * 1024,
        ),
        cost_estimate=pl.CostEstimate(
            flops=2 * N * Ho * Wo * 9 * C * Cout,
            transcendentals=0,
            bytes_accessed=xr.size * 2 + w_t.size * 2
            + N * Cout * Ho * Wo * jnp.dtype(out_dtype).itemsize,
        ),
    )(xr, xr, w_t, b_col)

    return out.reshape(N, Cout, Ho, Wo)   # free reshape; already channel-major


# ---------------------------------------------------------------------------
# Pallas kernel 2: 2x2 stride-2 average pool as a pure VPU reduction.
# Input is pre-reshaped (layout-preserving, free) to (N, Ho, 2, Wo, 2*C) so
# the kernel only does leading-dim selects + lane slices + 3 adds + 1 mul.
# ---------------------------------------------------------------------------
def _avgpool_2x2_kernel(x_ref, o_ref):
    C = o_ref.shape[-1]
    x = x_ref[...]                        # (1, tho, 2, Wo, 2*C)
    rows = x[:, :, 0] + x[:, :, 1]        # sum the two H rows of each window
    left = rows[..., :C]                  # w = 2*wo
    right = rows[..., C:]                 # w = 2*wo + 1
    o_ref[...] = ((left + right) * 0.25).astype(o_ref.dtype)


def _pallas_avgpool_2x2(x_nhwc):
    N, H, W, C = x_nhwc.shape
    assert H % 2 == 0 and W % 2 == 0
    Ho, Wo = H // 2, W // 2

    # Free reshape (pure dim split, same memory layout): pair rows / columns.
    x5 = x_nhwc.reshape(N, Ho, 2, Wo, 2 * C)

    # Largest divisor of Ho whose input block stays <= ~8 MiB.
    row_bytes = 2 * Wo * 2 * C * x_nhwc.dtype.itemsize
    tho = 1
    for d in range(Ho, 0, -1):
        if Ho % d == 0 and d * row_bytes <= (8 << 20):
            tho = d
            break

    return pl.pallas_call(
        _avgpool_2x2_kernel,
        out_shape=jax.ShapeDtypeStruct((N, Ho, Wo, C), x_nhwc.dtype),
        grid_spec=pltpu.PrefetchScalarGridSpec(
            num_scalar_prefetch=0,
            grid=(N, Ho // tho),
            in_specs=[pl.BlockSpec((1, tho, 2, Wo, 2 * C),
                                   lambda n, r: (n, r, 0, 0, 0))],
            out_specs=pl.BlockSpec((1, tho, Wo, C),
                                   lambda n, r: (n, r, 0, 0)),
        ),
        compiler_params=pltpu.CompilerParams(
            dimension_semantics=("parallel", "parallel"),
            vmem_limit_bytes=48 * 1024 * 1024,
        ),
    )(x5)


# ---------------------------------------------------------------------------
# Downsample module (2D)
# ---------------------------------------------------------------------------
class Downsample:
    """JAX/Pallas port of guided_diffusion.unet.Downsample (forward only)."""

    def __init__(self, channels, use_conv, dims=2, out_channels=None, key=None):
        # TODO(synk): dims=1 and dims=3 variants not implemented (2D only).
        assert dims == 2
        self.channels = channels
        self.out_channels = out_channels or channels
        self.use_conv = use_conv
        if use_conv:
            # conv_nd(2, C, Cout, 3, stride=2, padding=1) parameters,
            # deterministically initialized like torch's default uniform init.
            k = key if key is not None else jax.random.PRNGKey(0)
            k1, k2 = jax.random.split(k)
            fan_in = channels * 3 * 3
            bound = 1.0 / (fan_in ** 0.5)
            self.weight = jax.random.uniform(
                k1, (self.out_channels, channels, 3, 3), jnp.float32, -bound, bound)
            self.bias = jax.random.uniform(
                k2, (self.out_channels,), jnp.float32, -bound, bound)
        else:
            assert self.channels == self.out_channels

    def __call__(self, x):
        # x: NCHW, same as PyTorch.
        assert x.shape[1] == self.channels
        N, C, H, W = x.shape

        if self.use_conv:
            # Fully fused conv: one prep pass (transpose+cast+pad), kernel
            # streams halo'd row strips and writes channel-major (NCHW) out.
            return _pallas_conv3x3_s2(x, self.weight, self.bias)

        x_nhwc = jnp.transpose(x, (0, 2, 3, 1)).astype(jnp.float32)
        out = _pallas_avgpool_2x2(x_nhwc)
        return jnp.transpose(out, (0, 3, 1, 2))   # back to NCHW


# ---------------------------------------------------------------------------
# Main: deterministic inputs, run both branches, verify vs lax references.
# ---------------------------------------------------------------------------
if __name__ == "__main__":
    key = jax.random.PRNGKey(0)
    kx, kp = jax.random.split(key)
    N, C, H, W = 2, 4, 16, 16
    x = jax.random.normal(kx, (N, C, H, W), jnp.float32)

    # use_conv=True path
    down_conv = Downsample(channels=C, use_conv=True, dims=2, key=kp)
    y_conv = jax.block_until_ready(down_conv(x))

    # Reference uses the same bf16-rounded inputs the kernel feeds the MXU,
    # with f32 (HIGHEST) accumulation — matches the kernel's numerics.
    xq = x.astype(jnp.bfloat16).astype(jnp.float32)
    wq = down_conv.weight.astype(jnp.bfloat16).astype(jnp.float32)
    ref_conv = jax.lax.conv_general_dilated(
        xq, wq, window_strides=(2, 2), padding=((1, 1), (1, 1)),
        dimension_numbers=("NCHW", "OIHW", "NCHW"),
        precision=jax.lax.Precision.HIGHEST,
    ) + down_conv.bias.reshape(1, -1, 1, 1)

    # use_conv=False path (avg pool 2x2 stride 2)
    down_pool = Downsample(channels=C, use_conv=False, dims=2)
    y_pool = jax.block_until_ready(down_pool(x))

    ref_pool = jax.lax.reduce_window(
        x, 0.0, jax.lax.add, (1, 1, 2, 2), (1, 1, 2, 2), "VALID") / 4.0

    assert y_conv.shape == (N, C, H // 2, W // 2)
    assert y_pool.shape == (N, C, H // 2, W // 2)
    assert jnp.allclose(y_conv, ref_conv, atol=5e-3, rtol=5e-3), \
        float(jnp.max(jnp.abs(y_conv - ref_conv)))
    assert jnp.allclose(y_pool, ref_pool, atol=1e-5, rtol=1e-5), \
        float(jnp.max(jnp.abs(y_pool - ref_pool)))

    print("KERNEL_OK")
</pallas_src>

<mosaic_0001>
module attributes {stable_mosaic.version = 11 : i64} {
  func.func @_conv3x3s2_kernel(%arg0: i32, %arg1: i32, %arg2: i32, %arg3: memref<1x16x9x8xbf16, #tpu.memory_space<vmem>>, %arg4: memref<1x1x9x8xbf16, #tpu.memory_space<vmem>>, %arg5: memref<3x3x4x4xbf16, #tpu.memory_space<vmem>>, %arg6: memref<4x1xf32, #tpu.memory_space<vmem>>, %arg7: memref<1x4x64xf32, #tpu.memory_space<vmem>>) attributes {dimension_semantics = [#tpu.dimension_semantics<parallel>, #tpu.dimension_semantics<parallel>, #tpu.dimension_semantics<parallel>], iteration_bounds = array<i64: 1, 2, 1>, scalar_prefetch = 0 : i64, scratch_operands = 0 : i64, tpu.core_type = #tpu.core_type<tc>, window_params = [{transform_indices = @transform_0, window_bounds = array<i64: 1, 16, 9, 8>}, {transform_indices = @transform_1, window_bounds = array<i64: 1, 1, 9, 8>}, {transform_indices = @transform_2, window_bounds = array<i64: 3, 3, 4, 4>}, {transform_indices = @transform_3, window_bounds = array<i64: 4, 1>}, {transform_indices = @transform_4, window_bounds = array<i64: 1, 4, 64>}]} {
    %c0 = arith.constant 0 : index
    %c0_0 = arith.constant 0 : index
    %c0_1 = arith.constant 0 : index
    %c0_2 = arith.constant 0 : index
    %0 = vector.load %arg3[%c0, %c0_0, %c0_1, %c0_2] : memref<1x16x9x8xbf16, #tpu.memory_space<vmem>>, vector<1x16x9x8xbf16>
    %1 = vector.shape_cast %0 : vector<1x16x9x8xbf16> to vector<16x9x8xbf16>
    %2 = vector.shape_cast %1 : vector<16x9x8xbf16> to vector<8x2x9x8xbf16>
    %c0_3 = arith.constant 0 : index
    %c0_4 = arith.constant 0 : index
    %c0_5 = arith.constant 0 : index
    %c0_6 = arith.constant 0 : index
    %3 = vector.load %arg4[%c0_3, %c0_4, %c0_5, %c0_6] : memref<1x1x9x8xbf16, #tpu.memory_space<vmem>>, vector<1x1x9x8xbf16>
    %4 = vector.shape_cast %3 : vector<1x1x9x8xbf16> to vector<1x9x8xbf16>
    %5 = vector.extract_strided_slice %2 {offsets = [0, 0, 0, 0], sizes = [8, 1, 9, 8], strides = [1, 1, 1, 1]} : vector<8x2x9x8xbf16> to vector<8x1x9x8xbf16>
    %6 = vector.shape_cast %5 : vector<8x1x9x8xbf16> to vector<8x9x8xbf16>
    %7 = vector.extract_strided_slice %2 {offsets = [0, 1, 0, 0], sizes = [8, 1, 9, 8], strides = [1, 1, 1, 1]} : vector<8x2x9x8xbf16> to vector<8x1x9x8xbf16>
    %8 = vector.shape_cast %7 : vector<8x1x9x8xbf16> to vector<8x9x8xbf16>
    %9 = vector.extract_strided_slice %6 {offsets = [1, 0, 0], sizes = [7, 9, 8], strides = [1, 1, 1]} : vector<8x9x8xbf16> to vector<7x9x8xbf16>
    %10 = tpu.concatenate %9, %4 in 0 : vector<7x9x8xbf16>, vector<1x9x8xbf16> -> vector<8x9x8xbf16>
    %cst = arith.constant 0.000000e+00 : f32
    %11 = vector.broadcast %cst : f32 to vector<4x64xf32>
    %12 = vector.extract_strided_slice %6 {offsets = [0, 0, 0], sizes = [8, 8, 4], strides = [1, 1, 1]} : vector<8x9x8xbf16> to vector<8x8x4xbf16>
    %13 = vector.shape_cast %12 : vector<8x8x4xbf16> to vector<64x4xbf16>
    %c0_7 = arith.constant 0 : index
    %c0_8 = arith.constant 0 : index
    %c0_9 = arith.constant 0 : index
    %c0_10 = arith.constant 0 : index
    %14 = vector.load %arg5[%c0_7, %c0_8, %c0_9, %c0_10] : memref<3x3x4x4xbf16, #tpu.memory_space<vmem>>, vector<1x1x4x4xbf16>
    %15 = vector.shape_cast %14 : vector<1x1x4x4xbf16> to vector<4x4xbf16>
    %cst_11 = arith.constant dense<0.000000e+00> : vector<4x64xf32>
    %16 = tpu.matmul %15, %13, %cst_11 {dimension_numbers = #tpu.dot_dimension_numbers<[1], [1], [0], [0], [0, 0, 1, 0], [], []>} : vector<4x4xbf16>, vector<64x4xbf16>, vector<4x64xf32> -> vector<4x64xf32>
    %17 = arith.addf %11, %16 : vector<4x64xf32>
    %18 = vector.extract_strided_slice %6 {offsets = [0, 0, 4], sizes = [8, 8, 4], strides = [1, 1, 1]} : vector<8x9x8xbf16> to vector<8x8x4xbf16>
    %19 = vector.shape_cast %18 : vector<8x8x4xbf16> to vector<64x4xbf16>
    %c0_12 = arith.constant 0 : index
    %c1 = arith.constant 1 : index
    %c0_13 = arith.constant 0 : index
    %c0_14 = arith.constant 0 : index
    %20 = vector.load %arg5[%c0_12, %c1, %c0_13, %c0_14] : memref<3x3x4x4xbf16, #tpu.memory_space<vmem>>, vector<1x1x4x4xbf16>
    %21 = vector.shape_cast %20 : vector<1x1x4x4xbf16> to vector<4x4xbf16>
    %cst_15 = arith.constant dense<0.000000e+00> : vector<4x64xf32>
    %22 = tpu.matmul %21, %19, %cst_15 {dimension_numbers = #tpu.dot_dimension_numbers<[1], [1], [0], [0], [0, 0, 1, 0], [], []>} : vector<4x4xbf16>, vector<64x4xbf16>, vector<4x64xf32> -> vector<4x64xf32>
    %23 = arith.addf %17, %22 : vector<4x64xf32>
    %24 = vector.extract_strided_slice %6 {offsets = [0, 1, 0], sizes = [8, 8, 4], strides = [1, 1, 1]} : vector<8x9x8xbf16> to vector<8x8x4xbf16>
    %25 = vector.shape_cast %24 : vector<8x8x4xbf16> to vector<64x4xbf16>
    %c0_16 = arith.constant 0 : index
    %c2 = arith.constant 2 : index
    %c0_17 = arith.constant 0 : index
    %c0_18 = arith.constant 0 : index
    %26 = vector.load %arg5[%c0_16, %c2, %c0_17, %c0_18] : memref<3x3x4x4xbf16, #tpu.memory_space<vmem>>, vector<1x1x4x4xbf16>
    %27 = vector.shape_cast %26 : vector<1x1x4x4xbf16> to vector<4x4xbf16>
    %cst_19 = arith.constant dense<0.000000e+00> : vector<4x64xf32>
    %28 = tpu.matmul %27, %25, %cst_19 {dimension_numbers = #tpu.dot_dimension_numbers<[1], [1], [0], [0], [0, 0, 1, 0], [], []>} : vector<4x4xbf16>, vector<64x4xbf16>, vector<4x64xf32> -> vector<4x64xf32>
    %29 = arith.addf %23, %28 : vector<4x64xf32>
    %30 = vector.extract_strided_slice %8 {offsets = [0, 0, 0], sizes = [8, 8, 4], strides = [1, 1, 1]} : vector<8x9x8xbf16> to vector<8x8x4xbf16>
    %31 = vector.shape_cast %30 : vector<8x8x4xbf16> to vector<64x4xbf16>
    %c1_20 = arith.constant 1 : index
    %c0_21 = arith.constant 0 : index
    %c0_22 = arith.constant 0 : index
    %c0_23 = arith.constant 0 : index
    %32 = vector.load %arg5[%c1_20, %c0_21, %c0_22, %c0_23] : memref<3x3x4x4xbf16, #tpu.memory_space<vmem>>, vector<1x1x4x4xbf16>
    %33 = vector.shape_cast %32 : vector<1x1x4x4xbf16> to vector<4x4xbf16>
    %cst_24 = arith.constant dense<0.000000e+00> : vector<4x64xf32>
    %34 = tpu.matmul %33, %31, %cst_24 {dimension_numbers = #tpu.dot_dimension_numbers<[1], [1], [0], [0], [0, 0, 1, 0], [], []>} : vector<4x4xbf16>, vector<64x4xbf16>, vector<4x64xf32> -> vector<4x64xf32>
    %35 = arith.addf %29, %34 : vector<4x64xf32>
    %36 = vector.extract_strided_slice %8 {offsets = [0, 0, 4], sizes = [8, 8, 4], strides = [1, 1, 1]} : vector<8x9x8xbf16> to vector<8x8x4xbf16>
    %37 = vector.shape_cast %36 : vector<8x8x4xbf16> to vector<64x4xbf16>
    %c1_25 = arith.constant 1 : index
    %c1_26 = arith.constant 1 : index
    %c0_27 = arith.constant 0 : index
    %c0_28 = arith.constant 0 : index
    %38 = vector.load %arg5[%c1_25, %c1_26, %c0_27, %c0_28] : memref<3x3x4x4xbf16, #tpu.memory_space<vmem>>, vector<1x1x4x4xbf16>
    %39 = vector.shape_cast %38 : vector<1x1x4x4xbf16> to vector<4x4xbf16>
    %cst_29 = arith.constant dense<0.000000e+00> : vector<4x64xf32>
    %40 = tpu.matmul %39, %37, %cst_29 {dimension_numbers = #tpu.dot_dimension_numbers<[1], [1], [0], [0], [0, 0, 1, 0], [], []>} : vector<4x4xbf16>, vector<64x4xbf16>, vector<4x64xf32> -> vector<4x64xf32>
    %41 = arith.addf %35, %40 : vector<4x64xf32>
    %42 = vector.extract_strided_slice %8 {offsets = [0, 1, 0], sizes = [8, 8, 4], strides = [1, 1, 1]} : vector<8x9x8xbf16> to vector<8x8x4xbf16>
    %43 = vector.shape_cast %42 : vector<8x8x4xbf16> to vector<64x4xbf16>
    %c1_30 = arith.constant 1 : index
    %c2_31 = arith.constant 2 : index
    %c0_32 = arith.constant 0 : index
    %c0_33 = arith.constant 0 : index
    %44 = vector.load %arg5[%c1_30, %c2_31, %c0_32, %c0_33] : memref<3x3x4x4xbf16, #tpu.memory_space<vmem>>, vector<1x1x4x4xbf16>
    %45 = vector.shape_cast %44 : vector<1x1x4x4xbf16> to vector<4x4xbf16>
    %cst_34 = arith.constant dense<0.000000e+00> : vector<4x64xf32>
    %46 = tpu.matmul %45, %43, %cst_34 {dimension_numbers = #tpu.dot_dimension_numbers<[1], [1], [0], [0], [0, 0, 1, 0], [], []>} : vector<4x4xbf16>, vector<64x4xbf16>, vector<4x64xf32> -> vector<4x64xf32>
    %47 = arith.addf %41, %46 : vector<4x64xf32>
    %48 = vector.extract_strided_slice %10 {offsets = [0, 0, 0], sizes = [8, 8, 4], strides = [1, 1, 1]} : vector<8x9x8xbf16> to vector<8x8x4xbf16>
    %49 = vector.shape_cast %48 : vector<8x8x4xbf16> to vector<64x4xbf16>
    %c2_35 = arith.constant 2 : index
    %c0_36 = arith.constant 0 : index
    %c0_37 = arith.constant 0 : index
    %c0_38 = arith.constant 0 : index
    %50 = vector.load %arg5[%c2_35, %c0_36, %c0_37, %c0_38] : memref<3x3x4x4xbf16, #tpu.memory_space<vmem>>, vector<1x1x4x4xbf16>
    %51 = vector.shape_cast %50 : vector<1x1x4x4xbf16> to vector<4x4xbf16>
    %cst_39 = arith.constant dense<0.000000e+00> : vector<4x64xf32>
    %52 = tpu.matmul %51, %49, %cst_39 {dimension_numbers = #tpu.dot_dimension_numbers<[1], [1], [0], [0], [0, 0, 1, 0], [], []>} : vector<4x4xbf16>, vector<64x4xbf16>, vector<4x64xf32> -> vector<4x64xf32>
    %53 = arith.addf %47, %52 : vector<4x64xf32>
    %54 = vector.extract_strided_slice %10 {offsets = [0, 0, 4], sizes = [8, 8, 4], strides = [1, 1, 1]} : vector<8x9x8xbf16> to vector<8x8x4xbf16>
    %55 = vector.shape_cast %54 : vector<8x8x4xbf16> to vector<64x4xbf16>
    %c2_40 = arith.constant 2 : index
    %c1_41 = arith.constant 1 : index
    %c0_42 = arith.constant 0 : index
    %c0_43 = arith.constant 0 : index
    %56 = vector.load %arg5[%c2_40, %c1_41, %c0_42, %c0_43] : memref<3x3x4x4xbf16, #tpu.memory_space<vmem>>, vector<1x1x4x4xbf16>
    %57 = vector.shape_cast %56 : vector<1x1x4x4xbf16> to vector<4x4xbf16>
    %cst_44 = arith.constant dense<0.000000e+00> : vector<4x64xf32>
    %58 = tpu.matmul %57, %55, %cst_44 {dimension_numbers = #tpu.dot_dimension_numbers<[1], [1], [0], [0], [0, 0, 1, 0], [], []>} : vector<4x4xbf16>, vector<64x4xbf16>, vector<4x64xf32> -> vector<4x64xf32>
    %59 = arith.addf %53, %58 : vector<4x64xf32>
    %60 = vector.extract_strided_slice %10 {offsets = [0, 1, 0], sizes = [8, 8, 4], strides = [1, 1, 1]} : vector<8x9x8xbf16> to vector<8x8x4xbf16>
    %61 = vector.shape_cast %60 : vector<8x8x4xbf16> to vector<64x4xbf16>
    %c2_45 = arith.constant 2 : index
    %c2_46 = arith.constant 2 : index
    %c0_47 = arith.constant 0 : index
    %c0_48 = arith.constant 0 : index
    %62 = vector.load %arg5[%c2_45, %c2_46, %c0_47, %c0_48] : memref<3x3x4x4xbf16, #tpu.memory_space<vmem>>, vector<1x1x4x4xbf16>
    %63 = vector.shape_cast %62 : vector<1x1x4x4xbf16> to vector<4x4xbf16>
    %cst_49 = arith.constant dense<0.000000e+00> : vector<4x64xf32>
    %64 = tpu.matmul %63, %61, %cst_49 {dimension_numbers = #tpu.dot_dimension_numbers<[1], [1], [0], [0], [0, 0, 1, 0], [], []>} : vector<4x4xbf16>, vector<64x4xbf16>, vector<4x64xf32> -> vector<4x64xf32>
    %65 = arith.addf %59, %64 : vector<4x64xf32>
    %c0_50 = arith.constant 0 : index
    %c0_51 = arith.constant 0 : index
    %66 = vector.load %arg6[%c0_50, %c0_51] : memref<4x1xf32, #tpu.memory_space<vmem>>, vector<4x1xf32>
    %67 = vector.broadcast %66 : vector<4x1xf32> to vector<4x64xf32>
    %68 = arith.addf %65, %67 : vector<4x64xf32>
    %c0_52 = arith.constant 0 : index
    %c0_53 = arith.constant 0 : index
    %c0_54 = arith.constant 0 : index
    %69 = vector.load %arg7[%c0_52, %c0_53, %c0_54] : memref<1x4x64xf32, #tpu.memory_space<vmem>>, vector<1x4x64xf32>
    %70 = vector.shape_cast %69 : vector<1x4x64xf32> to vector<4x64xf32>
    %71 = vector.shape_cast %68 : vector<4x64xf32> to vector<1x4x64xf32>
    tpu.vector_store %arg7[%c0_52, %c0_53, %c0_54], %71 {strides = array<i32>} : memref<1x4x64xf32, #tpu.memory_space<vmem>>, vector<1x4x64xf32>,
    return
  }
  func.func @transform_0(%arg0: i32, %arg1: i32, %arg2: i32) -> (i32, i32, i32, i32) {
    %c0_i32 = arith.constant 0 : i32
    %c0_i32_0 = arith.constant 0 : i32
    %c0_i32_1 = arith.constant 0 : i32
    return %arg1, %arg2, %c0_i32, %c0_i32_0 : i32, i32, i32, i32
  }
  func.func @transform_1(%arg0: i32, %arg1: i32, %arg2: i32) -> (i32, i32, i32, i32) {
    %c1_i32 = arith.constant 1 : i32
    %0 = arith.addi %arg2, %c1_i32 : i32
    %c16_i32 = arith.constant 16 : i32
    %1 = arith.muli %c16_i32, %0 : i32
    %c0_i32 = arith.constant 0 : i32
    %c0_i32_0 = arith.constant 0 : i32
    %c0_i32_1 = arith.constant 0 : i32
    return %arg1, %1, %c0_i32, %c0_i32_0 : i32, i32, i32, i32
  }
  func.func @transform_2(%arg0: i32, %arg1: i32, %arg2: i32) -> (i32, i32, i32, i32) {
    %c0_i32 = arith.constant 0 : i32
    %c0_i32_0 = arith.constant 0 : i32
    %c0_i32_1 = arith.constant 0 : i32
    %c0_i32_2 = arith.constant 0 : i32
    return %c0_i32, %c0_i32_0, %arg0, %c0_i32_1 : i32, i32, i32, i32
  }
  func.func @transform_3(%arg0: i32, %arg1: i32, %arg2: i32) -> (i32, i32) {
    %c0_i32 = arith.constant 0 : i32
    %c0_i32_0 = arith.constant 0 : i32
    return %arg0, %c0_i32 : i32, i32
  }
  func.func @transform_4(%arg0: i32, %arg1: i32, %arg2: i32) -> (i32, i32, i32) {
    %c0_i32 = arith.constant 0 : i32
    return %arg1, %arg0, %arg2 : i32, i32, i32
  }
}

</mosaic_0001>

<llo_original>
// kernel: tpu_custom_call.1
$region0: #{tpu_custom_call.1}
  #allocation0 [shape = 'u32[]', space=smem, size = 0x4, offset = 0x4, fixed_abs, tag = 'smem constant byte address 0x4 - core index']
  #allocation1 [shape = 'u32[72,128]{1,0:T(1,128)}', space=vmem, size = 0x9000, scoped, tag = 'internal scratch']
  %s0 = inlined_call_operand.vmem [shape: bf16[2,18,9,8], index: 0, kind: input, shape index: {}]
  %s1 = inlined_call_operand.vmem [shape: bf16[2,18,9,8], index: 1, kind: input, shape index: {}]
  %s2 = inlined_call_operand.vmem [shape: bf16[3,3,4,4], index: 2, kind: input, shape index: {}]
  %s3 = inlined_call_operand.vmem [shape: f32[4,1], index: 3, kind: input, shape index: {}]
  %s4 = inlined_call_operand.hbm [shape: f32[2,4,64], index: 4, kind: output, shape index: {}]
  %s5 = sld [smem:[#allocation0]]
  $region49: #{tpu_custom_call.1} parent=0
    _
  %s7 = ssub.s32 1, %s5
  %s8 = scalar_select 0, %s7, %s5
  $region1: #{tpu_custom_call.1} parent=0
    #allocation2 [shape = 'u8[4096]{0}', space=vmem, size = 0x1000, scoped, tag = 'output window, operand 0']
    #allocation3 [shape = 's32[2]{0}', space=sflag, size = 0x8, scoped, tag = 'scoped memory for tpu_custom_call.1']
    %9 = vsyncpa [#allocation3], 0
    %s10 = scalar_lea.sflag [#allocation3], 1
    %11 = vsyncpa %s10, 0
    loop: start=0, step=1, limit=4
    $region2: #{tpu_custom_call.1} parent=1 // loop_pre_header
      _
    $region3: #{tpu_custom_call.1} parent=1 // loop_header
      %s13 = sphi 0, %s17
      %p14 = scmp.ge.s32.totalorder %s13, 4
      %s20 = sphi 0, %s39
      %s21 = sphi 0, %s35
      %s22 = sphi 0, %s31
      %s23 = sphi 0, %s20
      %s24 = sphi 0, %s21
      %s25 = sphi 0, %s22
      %s26 = sphi 0, %s23
      %s27 = sphi 0, %s24
      %s28 = sphi 0, %s25
      %s44 = sphi 0, %s46
      %s47 = sphi 0, %s44
      %s48 = sphi 0, %s47
      %s64 = sphi 0, %s48
      %s76 = sphi 0, %s78
      %s79 = sphi 0, %s76
      %s80 = sphi 0, %s79
      %s96 = sphi 0, %s80
      %s102 = sphi 0, %s104
      %s105 = sphi 0, %s102
      %s106 = sphi 0, %s105
      %s122 = sphi 0, %s106
      %s128 = sphi 0, %s130
      %s131 = sphi 0, %s128
      %s132 = sphi 0, %s131
      %s148 = sphi 0, %s132
      %s158 = sphi 0, %s160
      %s161 = sphi 0, %s158
      %s162 = sphi 0, %s161
      %s178 = sphi 0, %s162
    $region4: #{tpu_custom_call.1} parent=1 // loop_header_branch
      %16 = sbr.rel (%p14) target = $region8
    $region5: #{tpu_custom_call.1} parent=1 // loop_body
      %s18 = ssub.s32 %s13, 1
      %s19 = ssub.s32 %s13, 2
      %s29 = sadd.s32 1, %s22
      %p30 = scmp.ge.s32.totalorder %s29, 1
      %s31 = scalar_select %p30, 0, %s29
      %s32 = sadd.s32 1, %s21
      %s33 = scalar_select %p30, %s32, %s21
      %p34 = scmp.ge.s32.totalorder %s33, 2
      %s35 = scalar_select %p34, 0, %s33
      %s36 = sadd.s32 1, %s20
      %s37 = scalar_select %p34, %s36, %s20
      %p38 = scmp.ge.s32.totalorder %s37, 1
      %s39 = scalar_select %p38, 0, %s37
      %s40 = ssub.s32 %s21, %s35
      %s41 = ssub.s32 %s22, %s31
      %s42 = sor.u32 %s40, %s41
      %p43 = scmp.eq.s32.totalorder %s42, 0
      %s45 = sadd.s32 %s44, 1
      %s46 = scalar_select %p43, %s44, %s45
      %p49 = pneg %p43
      %p50 = scmp.eq.s32.totalorder %s13, 1
      %p51 = por %p49, %p50
      %p52 = scmp.ne.s32.totalorder %s44, %s47
      %p53 = scmp.eq.s32.totalorder %s13, 0
      %p54 = por %p52, %p53
      %p55 = scmp.ne.s32.totalorder %s44, %s47
      %p56 = scmp.eq.s32.totalorder %s18, 1
      %p57 = por %p55, %p56
      %p58 = scmp.ne.s32.totalorder %s47, %s48
      %p59 = scmp.eq.s32.totalorder %s18, 0
      %p60 = por %p58, %p59
      %p61 = scmp.ne.s32.totalorder %s47, %s48
      %p62 = scmp.eq.s32.totalorder %s19, 1
      %p63 = por %p61, %p62
      %p65 = scmp.ne.s32.totalorder %s48, %s64
      %p66 = scmp.eq.s32.totalorder %s19, 0
      %p67 = por %p65, %p66
      %s68 = sadd.s32 %s22, 1
      %s69 = smul.u32 %s68, 16
      %s70 = sadd.s32 %s31, 1
      %s71 = smul.u32 %s70, 16
      %s72 = ssub.s32 %s21, %s35
      %s73 = ssub.s32 %s69, %s71
      %s74 = sor.u32 %s72, %s73
      %p75 = scmp.eq.s32.totalorder %s74, 0
      %s77 = sadd.s32 %s76, 1
      %s78 = scalar_select %p75, %s76, %s77
      %p81 = pneg %p75
      %p82 = scmp.eq.s32.totalorder %s13, 1
      %p83 = por %p81, %p82
      %p84 = scmp.ne.s32.totalorder %s76, %s79
      %p85 = scmp.eq.s32.totalorder %s13, 0
      %p86 = por %p84, %p85
      %p87 = scmp.ne.s32.totalorder %s76, %s79
      %p88 = scmp.eq.s32.totalorder %s18, 1
      %p89 = por %p87, %p88
      %p90 = scmp.ne.s32.totalorder %s79, %s80
      %p91 = scmp.eq.s32.totalorder %s18, 0
      %p92 = por %p90, %p91
      %p93 = scmp.ne.s32.totalorder %s79, %s80
      %p94 = scmp.eq.s32.totalorder %s19, 1
      %p95 = por %p93, %p94
      %p97 = scmp.ne.s32.totalorder %s80, %s96
      %p98 = scmp.eq.s32.totalorder %s19, 0
      %p99 = por %p97, %p98
      %s100 = ssub.s32 %s20, %s39
      %p101 = scmp.eq.s32.totalorder %s100, 0
      %s103 = sadd.s32 %s102, 1
      %s104 = scalar_select %p101, %s102, %s103
      %p107 = pneg %p101
      %p108 = scmp.eq.s32.totalorder %s13, 1
      %p109 = por %p107, %p108
      %p110 = scmp.ne.s32.totalorder %s102, %s105
      %p111 = scmp.eq.s32.totalorder %s13, 0
      %p112 = por %p110, %p111
      %p113 = scmp.ne.s32.totalorder %s102, %s105
      %p114 = scmp.eq.s32.totalorder %s18, 1
      %p115 = por %p113, %p114
      %p116 = scmp.ne.s32.totalorder %s105, %s106
      %p117 = scmp.eq.s32.totalorder %s18, 0
      %p118 = por %p116, %p117
      %p119 = scmp.ne.s32.totalorder %s105, %s106
      %p120 = scmp.eq.s32.totalorder %s19, 1
      %p121 = por %p119, %p120
      %p123 = scmp.ne.s32.totalorder %s106, %s122
      %p124 = scmp.eq.s32.totalorder %s19, 0
      %p125 = por %p123, %p124
      %s126 = ssub.s32 %s20, %s39
      %p127 = scmp.eq.s32.totalorder %s126, 0
      %s129 = sadd.s32 %s128, 1
      %s130 = scalar_select %p127, %s128, %s129
      %p133 = pneg %p127
      %p134 = scmp.eq.s32.totalorder %s13, 1
      %p135 = por %p133, %p134
      %p136 = scmp.ne.s32.totalorder %s128, %s131
      %p137 = scmp.eq.s32.totalorder %s13, 0
      %p138 = por %p136, %p137
      %p139 = scmp.ne.s32.totalorder %s128, %s131
      %p140 = scmp.eq.s32.totalorder %s18, 1
      %p141 = por %p139, %p140
      %p142 = scmp.ne.s32.totalorder %s131, %s132
      %p143 = scmp.eq.s32.totalorder %s18, 0
      %p144 = por %p142, %p143
      %p145 = scmp.ne.s32.totalorder %s131, %s132
      %p146 = scmp.eq.s32.totalorder %s19, 1
      %p147 = por %p145, %p146
      %p149 = scmp.ne.s32.totalorder %s132, %s148
      %p150 = scmp.eq.s32.totalorder %s19, 0
      %p151 = por %p149, %p150
      %s152 = ssub.s32 %s21, %s35
      %s153 = ssub.s32 %s20, %s39
      %s154 = sor.u32 %s152, %s153
      %s155 = ssub.s32 %s22, %s31
      %s156 = sor.u32 %s154, %s155
      %p157 = scmp.eq.s32.totalorder %s156, 0
      %s159 = sadd.s32 %s158, 1
      %s160 = scalar_select %p157, %s158, %s159
      %p163 = pneg %p157
      %p164 = scmp.eq.s32.totalorder %s13, 1
      %p165 = por %p163, %p164
      %p166 = scmp.ne.s32.totalorder %s158, %s161
      %p167 = scmp.eq.s32.totalorder %s13, 0
      %p168 = por %p166, %p167
      %p169 = scmp.ne.s32.totalorder %s158, %s161
      %p170 = scmp.eq.s32.totalorder %s18, 1
      %p171 = por %p169, %p170
      %p172 = scmp.ne.s32.totalorder %s161, %s162
      %p173 = scmp.eq.s32.totalorder %s18, 0
      %p174 = por %p172, %p173
      %p175 = scmp.ne.s32.totalorder %s161, %s162
      %p176 = scmp.eq.s32.totalorder %s19, 1
      %p177 = por %p175, %p176
      %p179 = scmp.ne.s32.totalorder %s162, %s178
      %p180 = scmp.eq.s32.totalorder %s19, 0
      %p181 = por %p179, %p180
      %p182 = scmp.le.s32.totalorder 1, %s13
      %p183 = scmp.lt.s32.totalorder %s13, 3
      %p184 = pnand %p182, %p183
      %p185 = pneg %p184
      // Predicated region
      $region9: #{tpu_custom_call.1} parent=5 // pred_check
        _
      $region10: #{tpu_custom_call.1} parent=5 // pred_check_branch
        %187 = sbr.rel (%p184) target = $region12
      $region11: #{tpu_custom_call.1} parent=5 // pred_region
        %s188 = ssub.s32 %s13, 1
        // Predicated region
        $region13: #{tpu_custom_call.1} parent=11 // pred_check
          %p189 = pneg %p118
        $region14: #{tpu_custom_call.1} parent=11 // pred_check_branch
          %191 = sbr.rel (%p189) target = $region16
        $region15: #{tpu_custom_call.1} parent=11 // pred_region
          %p192 = scmp.lt.s32.totalorder %s23, 0
          %s193 = scalar_select %p192, %s23, 0
          %s194 = smul.addr %s193, 2
          %s195 = scalar_lea.vmem %s2, %s194
        $region16: #{tpu_custom_call.1} parent=11 // pred_fallthru
          _
        // Predicated region
        $region17: #{tpu_custom_call.1} parent=11 // pred_check
          %p196 = pneg %p144
        $region18: #{tpu_custom_call.1} parent=11 // pred_check_branch
          %198 = sbr.rel (%p196) target = $region20
        $region19: #{tpu_custom_call.1} parent=11 // pred_region
          %p199 = scmp.lt.s32.totalorder %s23, 0
          %s200 = scalar_select %p199, %s23, 0
          %s201 = smul.addr %s200, 4
          %s202 = scalar_lea.vmem %s3, %s201
        $region20: #{tpu_custom_call.1} parent=11 // pred_fallthru
          _
      $region12: #{tpu_custom_call.1} parent=5 // pred_fallthru
        _
      %p203 = scmp.lt.s32.totalorder %s13, 2
      // Predicated region
      $region21: #{tpu_custom_call.1} parent=5 // pred_check
        %p204 = pneg %p203
      $region22: #{tpu_custom_call.1} parent=5 // pred_check_branch
        %206 = sbr.rel (%p204) target = $region24
      $region23: #{tpu_custom_call.1} parent=5 // pred_region
        // Predicated region
        $region25: #{tpu_custom_call.1} parent=23 // pred_check
          %p207 = pneg %p54
        $region26: #{tpu_custom_call.1} parent=23 // pred_check_branch
          %209 = sbr.rel (%p207) target = $region28
        $region27: #{tpu_custom_call.1} parent=23 // pred_region
          %s210 = smul.u32 16, %s22
          %s211 = ssub.s32 18, %s210
          %p212 = scmp.lt.s32.totalorder %s211, 16
          %s213 = scalar_select %p212, %s211, 16
          %s214 = smul.u32 4, %s213
          %s215 = smul.u32 %s214, 2
          %p216 = scmp.lt.s32.totalorder %s21, 1
          %s217 = scalar_select %p216, %s21, 1
          %p218 = scmp.lt.s32.totalorder %s210, 17
          %s219 = scalar_select %p218, %s210, 17
          %s220 = smul.addr %s219, 2
          %s221 = smul.addr %s217, 36
          %s222 = sadd.s32 %s220, %s221
          %s223 = smul.addr %s222, 4
          %s224 = scalar_lea.vmem %s0, %s223
          %s225 = smul.u32 16, %s22
          %s226 = ssub.s32 18, %s225
          %p227 = scmp.lt.s32.totalorder %s226, 16
          %s228 = scalar_select %p227, %s226, 16
          %s229 = smul.u32 4, %s228
          %s230 = smul.u32 %s229, 2
        $region28: #{tpu_custom_call.1} parent=23 // pred_fallthru
          _
        // Predicated region
        $region29: #{tpu_custom_call.1} parent=23 // pred_check
          %p231 = pneg %p86
        $region30: #{tpu_custom_call.1} parent=23 // pred_check_branch
          %233 = sbr.rel (%p231) target = $region32
        $region31: #{tpu_custom_call.1} parent=23 // pred_region
          %s234 = sadd.s32 %s22, 1
          %s235 = smul.u32 %s234, 16
          %p236 = scmp.lt.s32.totalorder %s21, 1
          %s237 = scalar_select %p236, %s21, 1
          %p238 = scmp.lt.s32.totalorder %s235, 17
          %s239 = scalar_select %p238, %s235, 17
          %s240 = smul.addr %s239, 2
          %s241 = smul.addr %s237, 36
          %s242 = sadd.s32 %s240, %s241
          %s243 = smul.addr %s242, 4
          %s244 = scalar_lea.vmem %s1, %s243
          %s245 = sadd.s32 %s22, 1
          %s246 = smul.u32 %s245, 16
        $region32: #{tpu_custom_call.1} parent=23 // pred_fallthru
          _
      $region24: #{tpu_custom_call.1} parent=5 // pred_fallthru
        _
      %p247 = scmp.le.s32.totalorder 1, %s13
      %p248 = scmp.lt.s32.totalorder %s13, 3
      %p249 = pnand %p247, %p248
      %p250 = pneg %p249
      // Predicated region
      $region33: #{tpu_custom_call.1} parent=5 // pred_check
        _
      $region34: #{tpu_custom_call.1} parent=5 // pred_check_branch
        %252 = sbr.rel (%p249) target = $region36
      $region35: #{tpu_custom_call.1} parent=5 // pred_region
        %s253 = ssub.s32 %s13, 1
        %s254 = smul.u32 16, %s25
        %s255 = ssub.s32 18, %s254
        %p256 = scmp.lt.s32.totalorder %s255, 16
        %s257 = scalar_select %p256, %s255, 16
        %s258 = smul.u32 4, %s257
        %s259 = smul.u32 %s258, 2
        %p260 = scmp.lt.s32.totalorder %s24, 1
        %s261 = scalar_select %p260, %s24, 1
        %p262 = scmp.lt.s32.totalorder %s254, 17
        %s263 = scalar_select %p262, %s254, 17
        %s264 = smul.addr %s263, 2
        %s265 = smul.addr %s261, 36
        %s266 = sadd.s32 %s264, %s265
        %s267 = smul.addr %s266, 4
        %s268 = scalar_lea.vmem %s0, %s267
        %p269 = pneg %p60
        %p270 = pneg %p57
        %s271 = sadd.s32 %s25, 1
        %s272 = smul.u32 %s271, 16
        %p273 = scmp.lt.s32.totalorder %s24, 1
        %s274 = scalar_select %p273, %s24, 1
        %p275 = scmp.lt.s32.totalorder %s272, 17
        %s276 = scalar_select %p275, %s272, 17
        %s277 = smul.addr %s276, 2
        %s278 = smul.addr %s274, 36
        %s279 = sadd.s32 %s277, %s278
        %s280 = smul.addr %s279, 4
        %s281 = scalar_lea.vmem %s1, %s280
        %p282 = pneg %p92
        %p283 = pneg %p89
        %p284 = scmp.lt.s32.totalorder %s23, 0
        %s285 = scalar_select %p284, %s23, 0
        %s286 = smul.addr %s285, 2
        %s287 = scalar_lea.vmem %s2, %s286
        %p288 = pneg %p118
        %p289 = pneg %p115
        %p290 = scmp.lt.s32.totalorder %s23, 0
        %s291 = scalar_select %p290, %s23, 0
        %s292 = smul.addr %s291, 4
        %s293 = scalar_lea.vmem %s3, %s292
        %p294 = pneg %p144
        %p295 = pneg %p141
        %p296 = pneg %p174
        %p297 = pneg %p171
        %s298 = sand.u32 %s161, 1
        %s299 = scalar_lea.sflag [#allocation3], %s298
        %s300 = sand.u32 %s161, 1
        %s301 = smul.addr %s300, 4
        %s302 = scalar_lea.vmem [#allocation2], %s301
        %s303 = smul.u32 16, %s25
        %s304 = ssub.s32 18, %s303
        %p305 = scmp.lt.s32.totalorder %s304, 16
        %s306 = scalar_select %p305, %s304, 16
        %s307 = smul.u32 4, %s306
        %s308 = smul.u32 %s307, 2
        %p309 = scmp.lt.s32.totalorder %s24, 1
        %s310 = scalar_select %p309, %s24, 1
        %p311 = scmp.lt.s32.totalorder %s303, 17
        %s312 = scalar_select %p311, %s303, 17
        %s313 = smul.addr %s312, 2
        %s314 = smul.addr %s310, 36
        %s315 = sadd.s32 %s313, %s314
        %s316 = smul.addr %s315, 4
        %s317 = scalar_lea.vmem %s0, %s316
        %s318 = smul.u32 16, %s25
        %s319 = ssub.s32 18, %s318
        %p320 = scmp.lt.s32.totalorder %s319, 16
        %s321 = scalar_select %p320, %s319, 16
        %s322 = smul.u32 4, %s321
        %s323 = smul.u32 %s322, 2
        %s324 = sadd.s32 %s25, 1
        %s325 = smul.u32 %s324, 16
        %p326 = scmp.lt.s32.totalorder %s24, 1
        %s327 = scalar_select %p326, %s24, 1
        %p328 = scmp.lt.s32.totalorder %s325, 17
        %s329 = scalar_select %p328, %s325, 17
        %s330 = smul.addr %s329, 2
        %s331 = smul.addr %s327, 36
        %s332 = sadd.s32 %s330, %s331
        %s333 = smul.addr %s332, 4
        %s334 = scalar_lea.vmem %s1, %s333
        %s335 = sadd.s32 %s25, 1
        %s336 = smul.u32 %s335, 16
        %p337 = scmp.lt.s32.totalorder %s23, 0
        %s338 = scalar_select %p337, %s23, 0
        %s339 = smul.addr %s338, 2
        %s340 = scalar_lea.vmem %s2, %s339
        %p341 = scmp.lt.s32.totalorder %s23, 0
        %s342 = scalar_select %p341, %s23, 0
        %s343 = smul.addr %s342, 4
        %s344 = scalar_lea.vmem %s3, %s343
        %v346 = vld [vmem:[%s317] sm:$0xf]
        %v347 = vld [vmem:[%s317 + $0x4] sm:$0x1]
        %v348 = vld [vmem:[%s317 + $0x8] sm:$0xf]
        %v349 = vld [vmem:[%s317 + $0xc] sm:$0x1]
        %v350 = vld [vmem:[%s317 + $0x10] sm:$0xf]
        %v351 = vld [vmem:[%s317 + $0x14] sm:$0x1]
        %v352 = vld [vmem:[%s317 + $0x18] sm:$0xf]
        %v353 = vld [vmem:[%s317 + $0x1c] sm:$0x1]
        %v354 = vld [vmem:[%s317 + $0x20] sm:$0xf]
        %v355 = vld [vmem:[%s317 + $0x24] sm:$0x1]
        %v356 = vld [vmem:[%s317 + $0x28] sm:$0xf]
        %v357 = vld [vmem:[%s317 + $0x2c] sm:$0x1]
        %v358 = vld [vmem:[%s317 + $0x30] sm:$0xf]
        %v359 = vld [vmem:[%s317 + $0x34] sm:$0x1]
        %v360 = vld [vmem:[%s317 + $0x38] sm:$0xf]
        %v361 = vld [vmem:[%s317 + $0x3c] sm:$0x1]
        %v362 = vld [vmem:[%s317 + $0x40] sm:$0xf]
        %v363 = vld [vmem:[%s317 + $0x44] sm:$0x1]
        %v364 = vld [vmem:[%s317 + $0x48] sm:$0xf]
        %v365 = vld [vmem:[%s317 + $0x4c] sm:$0x1]
        %v366 = vld [vmem:[%s317 + $0x50] sm:$0xf]
        %v367 = vld [vmem:[%s317 + $0x54] sm:$0x1]
        %v368 = vld [vmem:[%s317 + $0x58] sm:$0xf]
        %v369 = vld [vmem:[%s317 + $0x5c] sm:$0x1]
        %v370 = vld [vmem:[%s317 + $0x60] sm:$0xf]
        %v371 = vld [vmem:[%s317 + $0x64] sm:$0x1]
        %v372 = vld [vmem:[%s317 + $0x68] sm:$0xf]
        %v373 = vld [vmem:[%s317 + $0x6c] sm:$0x1]
        %v374 = vld [vmem:[%s317 + $0x70] sm:$0xf]
        %v375 = vld [vmem:[%s317 + $0x74] sm:$0x1]
        %v376 = vld [vmem:[%s317 + $0x78] sm:$0xf]
        %v377 = vld [vmem:[%s317 + $0x7c] sm:$0x1]
        %v378 = vld [vmem:[%s334] sm:$0xf]
        %v379 = vld [vmem:[%s334 + $0x4] sm:$0x1]
        %v380 = vld [vmem:[%s340] sm:$0x3]
        %s381 = scalar_lea.vmem %s340, 2
        %v382 = vld [vmem:[%s381] sm:$0x3]
        %v391 = vunpack.c.l.b16 %v346
        %v392 = vunpack.c.l.b16 %v350
        %v393 = vunpack.c.l.b16 %v354
        %v394 = vunpack.c.l.b16 %v358
        %v395 = vunpack.c.l.b16 %v362
        %v396 = vunpack.c.l.b16 %v366
        %v397 = vunpack.c.l.b16 %v370
        %v398 = vunpack.c.l.b16 %v374
        %v399 = vpack.c.b16 %v392, %v391
        %v400 = vpack.c.b16 %v394, %v393
        %v401 = vpack.c.b16 %v396, %v395
        %v402 = vpack.c.b16 %v398, %v397
        %403 = vrot.lane.b32.xlu0 %v399, 124
        %v404 = vpop.permute.xlu0 %403
        %405 = vrot.lane.b32.xlu0 %v400, 124
        %v406 = vpop.permute.xlu0 %405
        %407 = vrot.lane.b32.xlu0 %v401, 124
        %v408 = vpop.permute.xlu0 %407
        %409 = vrot.lane.b32.xlu0 %v402, 124
        %v410 = vpop.permute.xlu0 %409
        %vm411 = vcmask 31744
        %v413 = vsel %vm411, %v382, 0
        %v416 = vsel %vm411, %v404, 0
        %v419 = vsel %vm411, %v406, 0
        %v422 = vsel %vm411, %v408, 0
        %v425 = vsel %vm411, %v410, 0
        %427 = vmatpush.bf16.xpose.msra.mxu0 0
        %428 = vmatpush.bf16.xpose.msra.mxu0 0
        %429 = vmatpush.bf16.xpose.msra.mxu0 0
        %430 = vmatpush.bf16.xpose.msra.mxu0 0
        %431 = vmatpush.bf16.xpose.msra.mxu0 %v425
        %432 = vmatpush.bf16.xpose.msra.mxu0 %v422
        %433 = vmatpush.bf16.xpose.msra.mxu0 %v419
        %434 = vmatpush.bf16.xpose.msra.mxu0 %v416
        %435 = vmatmul.bf16.gmra.mxu0 %v413
        %v436 = vpop.f32.mrf.mxu0
        %v437 = vadd.f32 0.0, %v436
        %v438 = vpop.f32.mrf.mxu0
        %439 = vdwg.mxu0
        %v441 = vsel %vm411, %v380, 0
        %v444 = vsel %vm411, %v399, 0
        %v447 = vsel %vm411, %v400, 0
        %v450 = vsel %vm411, %v401, 0
        %v453 = vsel %vm411, %v402, 0
        %455 = vmatpush.bf16.xpose.msra.mxu0 0
        %456 = vmatpush.bf16.xpose.msra.mxu0 0
        %457 = vmatpush.bf16.xpose.msra.mxu0 0
        %458 = vmatpush.bf16.xpose.msra.mxu0 0
        %459 = vmatpush.bf16.xpose.msra.mxu0 %v453
        %460 = vmatpush.bf16.xpose.msra.mxu0 %v450
        %461 = vmatpush.bf16.xpose.msra.mxu0 %v447
        %462 = vmatpush.bf16.xpose.msra.mxu0 %v444
        %463 = vmatmul.bf16.gmra.mxu0 %v441
        %v464 = vpop.f32.mrf.mxu0
        %v465 = vadd.f32 %v437, %v464
        %v466 = vpop.f32.mrf.mxu0
        %467 = vdwg.mxu0
        %vm468 = vsmask.f32 3328
        %vm469 = vsmask.f32 7440
        %vm470 = vmor %vm468, %vm469
        %v472 = vshrl.u32 %v346, 16
        %v474 = vrot.slane %v472, 4
        %v475 = vshll.u32 %v346, 16
        %v477 = vrot.slane %v475, 5
        %v478 = vor.u32 %v474, %v477
        %v479 = vrot.slane %v478, 4
        %v481 = vshll.u32 %v347, 16
        %v483 = vrot.slane %v481, 5
        %v484 = vsel %vm470, %v479, %v483
        %v486 = vshrl.u32 %v350, 16
        %v488 = vrot.slane %v486, 4
        %v489 = vshll.u32 %v350, 16
        %v491 = vrot.slane %v489, 5
        %v492 = vor.u32 %v488, %v491
        %v493 = vrot.slane %v492, 4
        %v495 = vshll.u32 %v351, 16
        %v497 = vrot.slane %v495, 5
        %v498 = vsel %vm470, %v493, %v497
        %v500 = vshrl.u32 %v354, 16
        %v502 = vrot.slane %v500, 4
        %v503 = vshll.u32 %v354, 16
        %v505 = vrot.slane %v503, 5
        %v506 = vor.u32 %v502, %v505
        %v507 = vrot.slane %v506, 4
        %v509 = vshll.u32 %v355, 16
        %v511 = vrot.slane %v509, 5
        %v512 = vsel %vm470, %v507, %v511
        %v514 = vshrl.u32 %v358, 16
        %v516 = vrot.slane %v514, 4
        %v517 = vshll.u32 %v358, 16
        %v519 = vrot.slane %v517, 5
        %v520 = vor.u32 %v516, %v519
        %v521 = vrot.slane %v520, 4
        %v523 = vshll.u32 %v359, 16
        %v525 = vrot.slane %v523, 5
        %v526 = vsel %vm470, %v521, %v525
        %v528 = vshrl.u32 %v362, 16
        %v530 = vrot.slane %v528, 4
        %v531 = vshll.u32 %v362, 16
        %v533 = vrot.slane %v531, 5
        %v534 = vor.u32 %v530, %v533
        %v535 = vrot.slane %v534, 4
        %v537 = vshll.u32 %v363, 16
        %v539 = vrot.slane %v537, 5
        %v540 = vsel %vm470, %v535, %v539
        %v542 = vshrl.u32 %v366, 16
        %v544 = vrot.slane %v542, 4
        %v545 = vshll.u32 %v366, 16
        %v547 = vrot.slane %v545, 5
        %v548 = vor.u32 %v544, %v547
        %v549 = vrot.slane %v548, 4
        %v551 = vshll.u32 %v367, 16
        %v553 = vrot.slane %v551, 5
        %v554 = vsel %vm470, %v549, %v553
        %v556 = vshrl.u32 %v370, 16
        %v558 = vrot.slane %v556, 4
        %v559 = vshll.u32 %v370, 16
        %v561 = vrot.slane %v559, 5
        %v562 = vor.u32 %v558, %v561
        %v563 = vrot.slane %v562, 4
        %v565 = vshll.u32 %v371, 16
        %v567 = vrot.slane %v565, 5
        %v568 = vsel %vm470, %v563, %v567
        %v570 = vshrl.u32 %v374, 16
        %v572 = vrot.slane %v570, 4
        %v573 = vshll.u32 %v374, 16
        %v575 = vrot.slane %v573, 5
        %v576 = vor.u32 %v572, %v575
        %v577 = vrot.slane %v576, 4
        %v579 = vshll.u32 %v375, 16
        %v581 = vrot.slane %v579, 5
        %v582 = vsel %vm470, %v577, %v581
        %s583 = scalar_lea.vmem %s340, 4
        %v584 = vld [vmem:[%s583] sm:$0x3]
        %v585 = vunpack.c.l.b16 %v484
        %v586 = vunpack.c.l.b16 %v498
        %v587 = vunpack.c.l.b16 %v512
        %v588 = vunpack.c.l.b16 %v526
        %v589 = vunpack.c.l.b16 %v540
        %v590 = vunpack.c.l.b16 %v554
        %v591 = vunpack.c.l.b16 %v568
        %v592 = vunpack.c.l.b16 %v582
        %v593 = vpack.c.b16 %v586, %v585
        %v594 = vpack.c.b16 %v588, %v587
        %v595 = vpack.c.b16 %v590, %v589
        %v596 = vpack.c.b16 %v592, %v591
        %v598 = vsel %vm411, %v584, 0
        %v601 = vsel %vm411, %v593, 0
        %v604 = vsel %vm411, %v594, 0
        %v607 = vsel %vm411, %v595, 0
        %v610 = vsel %vm411, %v596, 0
        %612 = vmatpush.bf16.xpose.msra.mxu0 0
        %613 = vmatpush.bf16.xpose.msra.mxu0 0
        %614 = vmatpush.bf16.xpose.msra.mxu0 0
        %615 = vmatpush.bf16.xpose.msra.mxu0 0
        %616 = vmatpush.bf16.xpose.msra.mxu0 %v610
        %617 = vmatpush.bf16.xpose.msra.mxu0 %v607
        %618 = vmatpush.bf16.xpose.msra.mxu0 %v604
        %619 = vmatpush.bf16.xpose.msra.mxu0 %v601
        %620 = vmatmul.bf16.gmra.mxu0 %v598
        %v621 = vpop.f32.mrf.mxu0
        %v622 = vadd.f32 0.0, %v621
        %v623 = vpop.f32.mrf.mxu0
        %624 = vdwg.mxu0
        %v625 = vadd.f32 %v465, %v622
        %s626 = scalar_lea.vmem %s340, 6
        %v627 = vld [vmem:[%s626] sm:$0x3]
        %v636 = vunpack.c.l.b16 %v348
        %v637 = vunpack.c.l.b16 %v352
        %v638 = vunpack.c.l.b16 %v356
        %v639 = vunpack.c.l.b16 %v360
        %v640 = vunpack.c.l.b16 %v364
        %v641 = vunpack.c.l.b16 %v368
        %v642 = vunpack.c.l.b16 %v372
        %v643 = vunpack.c.l.b16 %v376
        %v644 = vpack.c.b16 %v637, %v636
        %v645 = vpack.c.b16 %v639, %v638
        %v646 = vpack.c.b16 %v641, %v640
        %v647 = vpack.c.b16 %v643, %v642
        %v649 = vsel %vm411, %v627, 0
        %v652 = vsel %vm411, %v644, 0
        %v655 = vsel %vm411, %v645, 0
        %v658 = vsel %vm411, %v646, 0
        %v661 = vsel %vm411, %v647, 0
        %663 = vmatpush.bf16.xpose.msra.mxu0 0
        %664 = vmatpush.bf16.xpose.msra.mxu0 0
        %665 = vmatpush.bf16.xpose.msra.mxu0 0
        %666 = vmatpush.bf16.xpose.msra.mxu0 0
        %667 = vmatpush.bf16.xpose.msra.mxu0 %v661
        %668 = vmatpush.bf16.xpose.msra.mxu0 %v658
        %669 = vmatpush.bf16.xpose.msra.mxu0 %v655
        %670 = vmatpush.bf16.xpose.msra.mxu0 %v652
        %671 = vmatmul.bf16.gmra.mxu0 %v649
        %v672 = vpop.f32.mrf.mxu0
        %v673 = vadd.f32 0.0, %v672
        %v674 = vpop.f32.mrf.mxu0
        %675 = vdwg.mxu0
        %v676 = vadd.f32 %v625, %v673
        %s677 = scalar_lea.vmem %s340, 8
        %v678 = vld [vmem:[%s677] sm:$0x3]
        %679 = vrot.lane.b32.xlu0 %v644, 124
        %v680 = vpop.permute.xlu0 %679
        %681 = vrot.lane.b32.xlu0 %v645, 124
        %v682 = vpop.permute.xlu0 %681
        %683 = vrot.lane.b32.xlu0 %v646, 124
        %v684 = vpop.permute.xlu0 %683
        %685 = vrot.lane.b32.xlu0 %v647, 124
        %v686 = vpop.permute.xlu0 %685
        %v688 = vsel %vm411, %v678, 0
        %v691 = vsel %vm411, %v680, 0
        %v694 = vsel %vm411, %v682, 0
        %v697 = vsel %vm411, %v684, 0
        %v700 = vsel %vm411, %v686, 0
        %702 = vmatpush.bf16.xpose.msra.mxu0 0
        %703 = vmatpush.bf16.xpose.msra.mxu0 0
        %704 = vmatpush.bf16.xpose.msra.mxu0 0
        %705 = vmatpush.bf16.xpose.msra.mxu0 0
        %706 = vmatpush.bf16.xpose.msra.mxu0 %v700
        %707 = vmatpush.bf16.xpose.msra.mxu0 %v697
        %708 = vmatpush.bf16.xpose.msra.mxu0 %v694
        %709 = vmatpush.bf16.xpose.msra.mxu0 %v691
        %710 = vmatmul.bf16.gmra.mxu0 %v688
        %v711 = vpop.f32.mrf.mxu0
        %v712 = vadd.f32 0.0, %v711
        %v713 = vpop.f32.mrf.mxu0
        %714 = vdwg.mxu0
        %v715 = vadd.f32 %v676, %v712
        %v717 = vshrl.u32 %v348, 16
        %v719 = vrot.slane %v717, 4
        %v720 = vshll.u32 %v348, 16
        %v722 = vrot.slane %v720, 5
        %v723 = vor.u32 %v719, %v722
        %v724 = vrot.slane %v723, 4
        %v726 = vshll.u32 %v349, 16
        %v728 = vrot.slane %v726, 5
        %v729 = vsel %vm470, %v724, %v728
        %v731 = vshrl.u32 %v352, 16
        %v733 = vrot.slane %v731, 4
        %v734 = vshll.u32 %v352, 16
        %v736 = vrot.slane %v734, 5
        %v737 = vor.u32 %v733, %v736
        %v738 = vrot.slane %v737, 4
        %v740 = vshll.u32 %v353, 16
        %v742 = vrot.slane %v740, 5
        %v743 = vsel %vm470, %v738, %v742
        %v745 = vshrl.u32 %v356, 16
        %v747 = vrot.slane %v745, 4
        %v748 = vshll.u32 %v356, 16
        %v750 = vrot.slane %v748, 5
        %v751 = vor.u32 %v747, %v750
        %v752 = vrot.slane %v751, 4
        %v754 = vshll.u32 %v357, 16
        %v756 = vrot.slane %v754, 5
        %v757 = vsel %vm470, %v752, %v756
        %v759 = vshrl.u32 %v360, 16
        %v761 = vrot.slane %v759, 4
        %v762 = vshll.u32 %v360, 16
        %v764 = vrot.slane %v762, 5
        %v765 = vor.u32 %v761, %v764
        %v766 = vrot.slane %v765, 4
        %v768 = vshll.u32 %v361, 16
        %v770 = vrot.slane %v768, 5
        %v771 = vsel %vm470, %v766, %v770
        %v773 = vshrl.u32 %v364, 16
        %v775 = vrot.slane %v773, 4
        %v776 = vshll.u32 %v364, 16
        %v778 = vrot.slane %v776, 5
        %v779 = vor.u32 %v775, %v778
        %v780 = vrot.slane %v779, 4
        %v782 = vshll.u32 %v365, 16
        %v784 = vrot.slane %v782, 5
        %v785 = vsel %vm470, %v780, %v784
        %v787 = vshrl.u32 %v368, 16
        %v789 = vrot.slane %v787, 4
        %v790 = vshll.u32 %v368, 16
        %v792 = vrot.slane %v790, 5
        %v793 = vor.u32 %v789, %v792
        %v794 = vrot.slane %v793, 4
        %v796 = vshll.u32 %v369, 16
        %v798 = vrot.slane %v796, 5
        %v799 = vsel %vm470, %v794, %v798
        %v801 = vshrl.u32 %v372, 16
        %v803 = vrot.slane %v801, 4
        %v804 = vshll.u32 %v372, 16
        %v806 = vrot.slane %v804, 5
        %v807 = vor.u32 %v803, %v806
        %v808 = vrot.slane %v807, 4
        %v810 = vshll.u32 %v373, 16
        %v812 = vrot.slane %v810, 5
        %v813 = vsel %vm470, %v808, %v812
        %v815 = vshrl.u32 %v376, 16
        %v817 = vrot.slane %v815, 4
        %v818 = vshll.u32 %v376, 16
        %v820 = vrot.slane %v818, 5
        %v821 = vor.u32 %v817, %v820
        %v822 = vrot.slane %v821, 4
        %v824 = vshll.u32 %v377, 16
        %v826 = vrot.slane %v824, 5
        %v827 = vsel %vm470, %v822, %v826
        %s828 = scalar_lea.vmem %s340, 10
        %v829 = vld [vmem:[%s828] sm:$0x3]
        %v830 = vunpack.c.l.b16 %v729
        %v831 = vunpack.c.l.b16 %v743
        %v832 = vunpack.c.l.b16 %v757
        %v833 = vunpack.c.l.b16 %v771
        %v834 = vunpack.c.l.b16 %v785
        %v835 = vunpack.c.l.b16 %v799
        %v836 = vunpack.c.l.b16 %v813
        %v837 = vunpack.c.l.b16 %v827
        %v838 = vpack.c.b16 %v831, %v830
        %v839 = vpack.c.b16 %v833, %v832
        %v840 = vpack.c.b16 %v835, %v834
        %v841 = vpack.c.b16 %v837, %v836
        %v843 = vsel %vm411, %v829, 0
        %v846 = vsel %vm411, %v838, 0
        %v849 = vsel %vm411, %v839, 0
        %v852 = vsel %vm411, %v840, 0
        %v855 = vsel %vm411, %v841, 0
        %857 = vmatpush.bf16.xpose.msra.mxu0 0
        %858 = vmatpush.bf16.xpose.msra.mxu0 0
        %859 = vmatpush.bf16.xpose.msra.mxu0 0
        %860 = vmatpush.bf16.xpose.msra.mxu0 0
        %861 = vmatpush.bf16.xpose.msra.mxu0 %v855
        %862 = vmatpush.bf16.xpose.msra.mxu0 %v852
        %863 = vmatpush.bf16.xpose.msra.mxu0 %v849
        %864 = vmatpush.bf16.xpose.msra.mxu0 %v846
        %865 = vmatmul.bf16.gmra.mxu0 %v843
        %v866 = vpop.f32.mrf.mxu0
        %v867 = vadd.f32 0.0, %v866
        %v868 = vpop.f32.mrf.mxu0
        %869 = vdwg.mxu0
        %v870 = vadd.f32 %v715, %v867
        %s871 = scalar_lea.vmem %s340, 12
        %v872 = vld [vmem:[%s871] sm:$0x3]
        %v874 = vunpack.c.l.b16 %v378
        %v875 = vpack.c.b16 %v393, %v392
        %v876 = vpack.c.b16 %v395, %v394
        %v877 = vpack.c.b16 %v397, %v396
        %v878 = vpack.c.b16 %v874, %v398
        %v880 = vsel %vm411, %v872, 0
        %v883 = vsel %vm411, %v875, 0
        %v886 = vsel %vm411, %v876, 0
        %v889 = vsel %vm411, %v877, 0
        %v892 = vsel %vm411, %v878, 0
        %894 = vmatpush.bf16.xpose.msra.mxu0 0
        %895 = vmatpush.bf16.xpose.msra.mxu0 0
        %896 = vmatpush.bf16.xpose.msra.mxu0 0
        %897 = vmatpush.bf16.xpose.msra.mxu0 0
        %898 = vmatpush.bf16.xpose.msra.mxu0 %v892
        %899 = vmatpush.bf16.xpose.msra.mxu0 %v889
        %900 = vmatpush.bf16.xpose.msra.mxu0 %v886
        %901 = vmatpush.bf16.xpose.msra.mxu0 %v883
        %902 = vmatmul.bf16.gmra.mxu0 %v880
        %v903 = vpop.f32.mrf.mxu0
        %v904 = vadd.f32 0.0, %v903
        %v905 = vpop.f32.mrf.mxu0
        %906 = vdwg.mxu0
        %v907 = vadd.f32 %v870, %v904
        %s908 = scalar_lea.vmem %s340, 14
        %v909 = vld [vmem:[%s908] sm:$0x3]
        %910 = vrot.lane.b32.xlu0 %v875, 124
        %v911 = vpop.permute.xlu0 %910
        %912 = vrot.lane.b32.xlu0 %v876, 124
        %v913 = vpop.permute.xlu0 %912
        %914 = vrot.lane.b32.xlu0 %v877, 124
        %v915 = vpop.permute.xlu0 %914
        %916 = vrot.lane.b32.xlu0 %v878, 124
        %v917 = vpop.permute.xlu0 %916
        %v919 = vsel %vm411, %v909, 0
        %v922 = vsel %vm411, %v911, 0
        %v925 = vsel %vm411, %v913, 0
        %v928 = vsel %vm411, %v915, 0
        %v931 = vsel %vm411, %v917, 0
        %933 = vmatpush.bf16.xpose.msra.mxu0 0
        %934 = vmatpush.bf16.xpose.msra.mxu0 0
        %935 = vmatpush.bf16.xpose.msra.mxu0 0
        %936 = vmatpush.bf16.xpose.msra.mxu0 0
        %937 = vmatpush.bf16.xpose.msra.mxu0 %v931
        %938 = vmatpush.bf16.xpose.msra.mxu0 %v928
        %939 = vmatpush.bf16.xpose.msra.mxu0 %v925
        %940 = vmatpush.bf16.xpose.msra.mxu0 %v922
        %941 = vmatmul.bf16.gmra.mxu0 %v919
        %v942 = vpop.f32.mrf.mxu0
        %v943 = vadd.f32 0.0, %v942
        %v944 = vpop.f32.mrf.mxu0
        %945 = vdwg.mxu0
        %v946 = vadd.f32 %v907, %v943
        %v948 = vshrl.u32 %v378, 16
        %v950 = vrot.slane %v948, 4
        %v951 = vshll.u32 %v378, 16
        %v953 = vrot.slane %v951, 5
        %v954 = vor.u32 %v950, %v953
        %v955 = vrot.slane %v954, 4
        %v957 = vshll.u32 %v379, 16
        %v959 = vrot.slane %v957, 5
        %v960 = vsel %vm470, %v955, %v959
        %s961 = scalar_lea.vmem %s340, 16
        %v962 = vld [vmem:[%s961] sm:$0x3]
        %v963 = vunpack.c.l.b16 %v960
        %v964 = vpack.c.b16 %v587, %v586
        %v965 = vpack.c.b16 %v589, %v588
        %v966 = vpack.c.b16 %v591, %v590
        %v967 = vpack.c.b16 %v963, %v592
        %v969 = vsel %vm411, %v962, 0
        %v972 = vsel %vm411, %v964, 0
        %v975 = vsel %vm411, %v965, 0
        %v978 = vsel %vm411, %v966, 0
        %v981 = vsel %vm411, %v967, 0
        %983 = vmatpush.bf16.xpose.msra.mxu0 0
        %984 = vmatpush.bf16.xpose.msra.mxu0 0
        %985 = vmatpush.bf16.xpose.msra.mxu0 0
        %986 = vmatpush.bf16.xpose.msra.mxu0 0
        %987 = vmatpush.bf16.xpose.msra.mxu0 %v981
        %988 = vmatpush.bf16.xpose.msra.mxu0 %v978
        %989 = vmatpush.bf16.xpose.msra.mxu0 %v975
        %990 = vmatpush.bf16.xpose.msra.mxu0 %v972
        %991 = vmatmul.bf16.gmra.mxu0 %v969
        %v992 = vpop.f32.mrf.mxu0
        %v993 = vadd.f32 0.0, %v992
        %v994 = vpop.f32.mrf.mxu0
        %995 = vdwg.mxu0
        %v996 = vadd.f32 %v946, %v993
        %v997 = vld [vmem:[%s344] sm:$0xf]
        %999 = vset.pattern.permute.xlu0 0
        %1000 = vperm.xlu0 %999, %v997
        %v1001 = vpop.permute.xlu0 %1000
        %v1003 = vadd.f32 %v996, %v1001
        %vm1004 = vcmask 519168
        %1005 = vst.msk [vmem:[%s302] sm:$0xf] %vm1004, %v1003
        %s1006 = sand.u32 %s161, 1
        %s1007 = scalar_lea.sflag [#allocation3], %s1006
        %s1008 = sand.u32 %s161, 1
        %s1009 = smul.addr %s1008, 4
        %s1010 = scalar_lea.vmem [#allocation2], %s1009
        // Predicated region
        $region37: #{tpu_custom_call.1} parent=35 // pred_check
          %p1011 = pneg %p171
        $region38: #{tpu_custom_call.1} parent=35 // pred_check_branch
          %1013 = sbr.rel (%p1011) target = $region40
        $region39: #{tpu_custom_call.1} parent=35 // pred_region
          %1015 = vsyncadd %s1007, 0
          %s1016 = sadd.s32 %s25, %s23
          %s1017 = sadd.s32 %s1016, %s24
          %s1018 = smul.addr %s1017, 4
          %s1019 = scalar_lea.hbm %s4, %s1018
          %s1021 = sshll.u32 %s1010, 4
          %s1022 = int_to_ptr.vmem [resolvable:$true] %s1021
          %s1023 = sshll.u32 %s1019, 4
          %s1024 = int_to_ptr.hbm [resolvable:$true] %s1023
          %1026 = dma.vmem_to_hbm [thread:$0]  %s1022, 64, %s1024, %s1007
        $region40: #{tpu_custom_call.1} parent=35 // pred_fallthru
          _
      $region36: #{tpu_custom_call.1} parent=5 // pred_fallthru
        _
      %p1027 = scmp.le.s32.totalorder 2, %s13
      // Predicated region
      $region41: #{tpu_custom_call.1} parent=5 // pred_check
        %p1028 = pneg %p1027
      $region42: #{tpu_custom_call.1} parent=5 // pred_check_branch
        %1030 = sbr.rel (%p1028) target = $region44
      $region43: #{tpu_custom_call.1} parent=5 // pred_region
        %s1031 = ssub.s32 %s13, 2
        // Predicated region
        $region45: #{tpu_custom_call.1} parent=43 // pred_check
          %p1032 = pneg %p177
        $region46: #{tpu_custom_call.1} parent=43 // pred_check_branch
          %1034 = sbr.rel (%p1032) target = $region48
        $region47: #{tpu_custom_call.1} parent=43 // pred_region
          %s1035 = sand.u32 %s162, 1
          %s1036 = scalar_lea.sflag [#allocation3], %s1035
          %s1037 = sand.u32 %s162, 1
          %s1038 = smul.addr %s1037, 4
          %s1039 = scalar_lea.vmem [#allocation2], %s1038
          %1041 = dma.done %s1036, 64
        $region48: #{tpu_custom_call.1} parent=43 // pred_fallthru
          _
      $region44: #{tpu_custom_call.1} parent=5 // pred_fallthru
        _
    $region6: #{tpu_custom_call.1} parent=1 // loop_footer
      %s17 = sadd.s32 1, %s13
    $region7: #{tpu_custom_call.1} parent=1 // loop_footer_branch
      %12 = sbr.rel target = $region3
    $region8: #{tpu_custom_call.1} parent=1 // loop_exit
      _
    %1042 = vsyncpa [#allocation3], 1
    %s1043 = scalar_lea.sflag [#allocation3], 1
    %1044 = vsyncpa %s1043, 1

</llo_original>
